<compile_context>
chip_gen: v6e
topology: v6e:2x2x1
jax: 0.10.0
libtpu: 0.0.40
codegen_flags: <defaults>
</compile_context>

<pallas_src>
import jax
import jax.numpy as jnp
from jax import lax
from jax.experimental import pallas as pl
from jax.experimental.pallas import tpu as pltpu

EPS = 1e-3  # CharbonnierLoss eps

# 1D Gaussian taps; the module's 2D kernel is outer(k1d, k1d) (separable).
_K1D = (0.05, 0.25, 0.4, 0.25, 0.05)
_K2D = [[a * b for b in _K1D] for a in _K1D]   # used only by the pure-JAX reference


def _shift_replicate(x, s, axis):
    """out[..., j, ...] = x[..., clamp(j + s, 0, n-1), ...]  (replicate boundary)."""
    n = x.shape[axis]
    if s == 0:
        return x
    if s > 0:
        body = lax.slice_in_dim(x, s, n, axis=axis)
        edge = lax.slice_in_dim(x, n - 1, n, axis=axis)
        parts = [body] + [edge] * s
    else:
        body = lax.slice_in_dim(x, 0, n + s, axis=axis)
        edge = lax.slice_in_dim(x, 0, 1, axis=axis)
        parts = [edge] * (-s) + [body]
    return jnp.concatenate(parts, axis=axis)


def _sep_gauss_1d(x, axis):
    """1D 5-tap Gaussian along `axis` with replicate boundary (4 shifts + 5 MACs)."""
    k0, k1, k2 = _K1D[0], _K1D[1], _K1D[2]
    s1 = _shift_replicate(x, 1, axis) + _shift_replicate(x, -1, axis)
    s2 = _shift_replicate(x, 2, axis) + _shift_replicate(x, -2, axis)
    return k2 * x + k1 * s1 + k0 * s2


def _conv_gauss(x):
    """Depthwise 5x5 Gaussian (replicate pad) on a (P, H, W) block, done separably."""
    return _sep_gauss_1d(_sep_gauss_1d(x, axis=1), axis=2)


def _edge_loss_kernel(x_ref, y_ref, out_ref):
    x = x_ref[...].astype(jnp.float32)   # (P, H, W)
    y = y_ref[...].astype(jnp.float32)
    d = x - y                            # linearity: lap(x) - lap(y) == lap(x - y)

    shape = d.shape
    rows = lax.broadcasted_iota(jnp.int32, shape, 1)
    cols = lax.broadcasted_iota(jnp.int32, shape, 2)
    even_mask = ((rows % 2) == 0) & ((cols % 2) == 0)   # built once per invocation

    filtered = _conv_gauss(d)
    new_filter = jnp.where(even_mask, filtered * 4.0, 0.0)   # "down * 4" scatter
    lap = d - _conv_gauss(new_filter)

    cb = jnp.sqrt(lap * lap + EPS * EPS)            # Charbonnier, elementwise
    partial = jnp.sum(jnp.sum(cb, axis=0))          # VPU plane-sum, then one 2D reduce
    # Lane-dense (1, 8, 128) per-block partial -> unmasked store, keeps the grid "parallel".
    out_ref[...] = jnp.full(out_ref.shape, partial, dtype=out_ref.dtype)


def edge_loss(x, y, planes_per_block=None):
    """x, y: (N, C, H, W). Mean Charbonnier loss between laplacian_kernel(x) and laplacian_kernel(y)."""
    B, C, H, W = x.shape
    assert C == 3, "EdgeLoss is defined for 3-channel inputs (as in the PyTorch module)."
    BC = B * C
    xf = x.reshape(BC, H, W)   # keep input dtype (bf16 inputs DMA at half the bytes)
    yf = y.reshape(BC, H, W)

    if planes_per_block is None:
        # VMEM heuristic: ~12 live (P,H,W) f32 arrays (2 inputs x 2 pipeline buffers
        # + conv temporaries); keep under ~12 MiB so the v5e 16 MiB default scoped
        # VMEM and v7x's smaller physical VMEM are both safe.
        budget_elems = (12 * 1024 * 1024) // (4 * 12)
        planes_per_block = max(1, min(BC, budget_elems // max(1, H * W)))
    P = int(planes_per_block)
    nblocks = pl.cdiv(BC, P)
    pad = nblocks * P - BC
    if pad:
        xf = jnp.pad(xf, ((0, pad), (0, 0), (0, 0)))
        yf = jnp.pad(yf, ((0, pad), (0, 0), (0, 0)))

    # TODO(synk): add spatial (row) tiling with a 2-row halo for planes so large that
    # even P=1 exceeds the VMEM budget (e.g. >1080p per plane).

    partials = pl.pallas_call(
        _edge_loss_kernel,
        out_shape=jax.ShapeDtypeStruct((nblocks, 8, 128), jnp.float32),
        grid=(nblocks,),
        in_specs=[
            pl.BlockSpec((P, H, W), lambda i: (i, 0, 0)),
            pl.BlockSpec((P, H, W), lambda i: (i, 0, 0)),
        ],
        out_specs=pl.BlockSpec((1, 8, 128), lambda i: (i, 0, 0)),
        compiler_params=pltpu.CompilerParams(dimension_semantics=("parallel",)),
    )(xf, yf)

    total = jnp.sum(partials[:, 0, 0])
    if pad:
        # Zero-padded planes contribute exactly sqrt(eps^2) per element; remove it.
        eps = jnp.float32(EPS)
        total = total - jnp.float32(pad * H * W) * jnp.sqrt(eps * eps)
    return total / jnp.float32(BC * H * W)


# ---------------- pure-JAX reference (original non-separable, two-laplacian math) ----------------
def _edge_loss_ref(x, y):
    B, C, H, W = x.shape

    def conv_gauss(img):  # img: (B, C, H, W)
        p = jnp.pad(img, ((0, 0), (0, 0), (2, 2), (2, 2)), mode="edge")
        out = jnp.zeros_like(img)
        for a in range(5):
            for b in range(5):
                out = out + _K2D[a][b] * p[:, :, a:a + H, b:b + W]
        return out

    def laplacian(img):
        f = conv_gauss(img)
        nf = jnp.zeros_like(f).at[:, :, ::2, ::2].set(f[:, :, ::2, ::2] * 4.0)
        return img - conv_gauss(nf)

    d = laplacian(x.astype(jnp.float32)) - laplacian(y.astype(jnp.float32))
    return jnp.mean(jnp.sqrt(d * d + EPS * EPS))


if __name__ == "__main__":
    key = jax.random.PRNGKey(0)
    kx, ky = jax.random.split(key)
    B, C, H, W = 2, 3, 16, 16
    x = jax.random.uniform(kx, (B, C, H, W), dtype=jnp.float32)
    y = jax.random.uniform(ky, (B, C, H, W), dtype=jnp.float32)

    out = jax.block_until_ready(edge_loss(x, y))
    ref = jax.block_until_ready(_edge_loss_ref(x, y))
    assert jnp.allclose(out, ref, rtol=1e-4, atol=1e-6), (out, ref)

    print("KERNEL_OK")
</pallas_src>

<mosaic_0001>
module attributes {stable_mosaic.version = 11 : i64} {
  func.func @_edge_loss_kernel(%arg0: i32, %arg1: memref<6x16x16xf32, #tpu.memory_space<vmem>>, %arg2: memref<6x16x16xf32, #tpu.memory_space<vmem>>, %arg3: memref<1x8x128xf32, #tpu.memory_space<vmem>>) attributes {dimension_semantics = [#tpu.dimension_semantics<parallel>], iteration_bounds = array<i64: 1>, scalar_prefetch = 0 : i64, scratch_operands = 0 : i64, tpu.core_type = #tpu.core_type<tc>, window_params = [{transform_indices = @transform_0, window_bounds = array<i64: 6, 16, 16>}, {transform_indices = @transform_1, window_bounds = array<i64: 6, 16, 16>}, {transform_indices = @transform_2, window_bounds = array<i64: 1, 8, 128>}]} {
    %c0 = arith.constant 0 : index
    %c0_0 = arith.constant 0 : index
    %c0_1 = arith.constant 0 : index
    %0 = vector.load %arg1[%c0, %c0_0, %c0_1] : memref<6x16x16xf32, #tpu.memory_space<vmem>>, vector<6x16x16xf32>
    %c0_2 = arith.constant 0 : index
    %c0_3 = arith.constant 0 : index
    %c0_4 = arith.constant 0 : index
    %1 = vector.load %arg2[%c0_2, %c0_3, %c0_4] : memref<6x16x16xf32, #tpu.memory_space<vmem>>, vector<6x16x16xf32>
    %2 = arith.subf %0, %1 : vector<6x16x16xf32>
    %3 = tpu.iota {dimensions = array<i32: 1>} : vector<6x16x16xi32>
    %4 = tpu.iota {dimensions = array<i32: 2>} : vector<6x16x16xi32>
    %c2_i32 = arith.constant 2 : i32
    %c0_i32 = arith.constant 0 : i32
    %5 = arith.cmpi eq, %c2_i32, %c0_i32 : i32
    %c1_i32 = arith.constant 1 : i32
    %6 = arith.select %5, %c1_i32, %c2_i32 : i32
    %7 = vector.broadcast %6 : i32 to vector<6x16x16xi32>
    %8 = arith.remsi %3, %7 : vector<6x16x16xi32>
    %c0_i32_5 = arith.constant 0 : i32
    %9 = vector.broadcast %c0_i32_5 : i32 to vector<6x16x16xi32>
    %10 = arith.cmpi ne, %8, %9 : vector<6x16x16xi32>
    %c0_i32_6 = arith.constant 0 : i32
    %11 = vector.broadcast %c0_i32_6 : i32 to vector<6x16x16xi32>
    %12 = arith.cmpi slt, %8, %11 : vector<6x16x16xi32>
    %c0_i32_7 = arith.constant 0 : i32
    %13 = arith.cmpi slt, %6, %c0_i32_7 : i32
    %14 = vector.broadcast %13 : i1 to vector<6x16x16xi1>
    %15 = vector.broadcast %14 : vector<6x16x16xi1> to vector<6x16x16xi1>
    %16 = arith.xori %12, %15 : vector<6x16x16xi1>
    %17 = arith.andi %16, %10 : vector<6x16x16xi1>
    %18 = vector.broadcast %6 : i32 to vector<6x16x16xi32>
    %19 = arith.addi %8, %18 : vector<6x16x16xi32>
    %20 = arith.select %17, %19, %8 : vector<6x16x16xi1>, vector<6x16x16xi32>
    %c0_i32_8 = arith.constant 0 : i32
    %21 = vector.broadcast %c0_i32_8 : i32 to vector<6x16x16xi32>
    %22 = arith.cmpi eq, %20, %21 : vector<6x16x16xi32>
    %c2_i32_9 = arith.constant 2 : i32
    %c0_i32_10 = arith.constant 0 : i32
    %23 = arith.cmpi eq, %c2_i32_9, %c0_i32_10 : i32
    %c1_i32_11 = arith.constant 1 : i32
    %24 = arith.select %23, %c1_i32_11, %c2_i32_9 : i32
    %25 = vector.broadcast %24 : i32 to vector<6x16x16xi32>
    %26 = arith.remsi %4, %25 : vector<6x16x16xi32>
    %c0_i32_12 = arith.constant 0 : i32
    %27 = vector.broadcast %c0_i32_12 : i32 to vector<6x16x16xi32>
    %28 = arith.cmpi ne, %26, %27 : vector<6x16x16xi32>
    %c0_i32_13 = arith.constant 0 : i32
    %29 = vector.broadcast %c0_i32_13 : i32 to vector<6x16x16xi32>
    %30 = arith.cmpi slt, %26, %29 : vector<6x16x16xi32>
    %c0_i32_14 = arith.constant 0 : i32
    %31 = arith.cmpi slt, %24, %c0_i32_14 : i32
    %32 = vector.broadcast %31 : i1 to vector<6x16x16xi1>
    %33 = vector.broadcast %32 : vector<6x16x16xi1> to vector<6x16x16xi1>
    %34 = arith.xori %30, %33 : vector<6x16x16xi1>
    %35 = arith.andi %34, %28 : vector<6x16x16xi1>
    %36 = vector.broadcast %24 : i32 to vector<6x16x16xi32>
    %37 = arith.addi %26, %36 : vector<6x16x16xi32>
    %38 = arith.select %35, %37, %26 : vector<6x16x16xi1>, vector<6x16x16xi32>
    %c0_i32_15 = arith.constant 0 : i32
    %39 = vector.broadcast %c0_i32_15 : i32 to vector<6x16x16xi32>
    %40 = arith.cmpi eq, %38, %39 : vector<6x16x16xi32>
    %41 = arith.andi %22, %40 : vector<6x16x16xi1>
    %42 = vector.extract_strided_slice %2 {offsets = [0, 1, 0], sizes = [6, 15, 16], strides = [1, 1, 1]} : vector<6x16x16xf32> to vector<6x15x16xf32>
    %43 = vector.extract_strided_slice %2 {offsets = [0, 15, 0], sizes = [6, 1, 16], strides = [1, 1, 1]} : vector<6x16x16xf32> to vector<6x1x16xf32>
    %44 = tpu.concatenate %42, %43 in 1 : vector<6x15x16xf32>, vector<6x1x16xf32> -> vector<6x16x16xf32>
    %45 = vector.extract_strided_slice %2 {offsets = [0, 0, 0], sizes = [6, 15, 16], strides = [1, 1, 1]} : vector<6x16x16xf32> to vector<6x15x16xf32>
    %46 = vector.extract_strided_slice %2 {offsets = [0, 0, 0], sizes = [6, 1, 16], strides = [1, 1, 1]} : vector<6x16x16xf32> to vector<6x1x16xf32>
    %47 = tpu.concatenate %46, %45 in 1 : vector<6x1x16xf32>, vector<6x15x16xf32> -> vector<6x16x16xf32>
    %48 = arith.addf %44, %47 : vector<6x16x16xf32>
    %49 = vector.extract_strided_slice %2 {offsets = [0, 2, 0], sizes = [6, 14, 16], strides = [1, 1, 1]} : vector<6x16x16xf32> to vector<6x14x16xf32>
    %50 = vector.extract_strided_slice %2 {offsets = [0, 15, 0], sizes = [6, 1, 16], strides = [1, 1, 1]} : vector<6x16x16xf32> to vector<6x1x16xf32>
    %51 = tpu.concatenate %49, %50, %50 in 1 : vector<6x14x16xf32>, vector<6x1x16xf32>, vector<6x1x16xf32> -> vector<6x16x16xf32>
    %52 = vector.extract_strided_slice %2 {offsets = [0, 0, 0], sizes = [6, 14, 16], strides = [1, 1, 1]} : vector<6x16x16xf32> to vector<6x14x16xf32>
    %53 = vector.extract_strided_slice %2 {offsets = [0, 0, 0], sizes = [6, 1, 16], strides = [1, 1, 1]} : vector<6x16x16xf32> to vector<6x1x16xf32>
    %54 = tpu.concatenate %53, %53, %52 in 1 : vector<6x1x16xf32>, vector<6x1x16xf32>, vector<6x14x16xf32> -> vector<6x16x16xf32>
    %55 = arith.addf %51, %54 : vector<6x16x16xf32>
    %cst = arith.constant 4.000000e-01 : f32
    %56 = vector.broadcast %cst : f32 to vector<6x16x16xf32>
    %57 = arith.mulf %56, %2 : vector<6x16x16xf32>
    %cst_16 = arith.constant 2.500000e-01 : f32
    %58 = vector.broadcast %cst_16 : f32 to vector<6x16x16xf32>
    %59 = arith.mulf %58, %48 : vector<6x16x16xf32>
    %60 = arith.addf %57, %59 : vector<6x16x16xf32>
    %cst_17 = arith.constant 5.000000e-02 : f32
    %61 = vector.broadcast %cst_17 : f32 to vector<6x16x16xf32>
    %62 = arith.mulf %61, %55 : vector<6x16x16xf32>
    %63 = arith.addf %60, %62 : vector<6x16x16xf32>
    %64 = vector.extract_strided_slice %63 {offsets = [0, 0, 1], sizes = [6, 16, 15], strides = [1, 1, 1]} : vector<6x16x16xf32> to vector<6x16x15xf32>
    %65 = vector.extract_strided_slice %63 {offsets = [0, 0, 15], sizes = [6, 16, 1], strides = [1, 1, 1]} : vector<6x16x16xf32> to vector<6x16x1xf32>
    %66 = tpu.concatenate %64, %65 in 2 : vector<6x16x15xf32>, vector<6x16x1xf32> -> vector<6x16x16xf32>
    %67 = vector.extract_strided_slice %63 {offsets = [0, 0, 0], sizes = [6, 16, 15], strides = [1, 1, 1]} : vector<6x16x16xf32> to vector<6x16x15xf32>
    %68 = vector.extract_strided_slice %63 {offsets = [0, 0, 0], sizes = [6, 16, 1], strides = [1, 1, 1]} : vector<6x16x16xf32> to vector<6x16x1xf32>
    %69 = tpu.concatenate %68, %67 in 2 : vector<6x16x1xf32>, vector<6x16x15xf32> -> vector<6x16x16xf32>
    %70 = arith.addf %66, %69 : vector<6x16x16xf32>
    %71 = vector.extract_strided_slice %63 {offsets = [0, 0, 2], sizes = [6, 16, 14], strides = [1, 1, 1]} : vector<6x16x16xf32> to vector<6x16x14xf32>
    %72 = vector.extract_strided_slice %63 {offsets = [0, 0, 15], sizes = [6, 16, 1], strides = [1, 1, 1]} : vector<6x16x16xf32> to vector<6x16x1xf32>
    %73 = tpu.concatenate %71, %72, %72 in 2 : vector<6x16x14xf32>, vector<6x16x1xf32>, vector<6x16x1xf32> -> vector<6x16x16xf32>
    %74 = vector.extract_strided_slice %63 {offsets = [0, 0, 0], sizes = [6, 16, 14], strides = [1, 1, 1]} : vector<6x16x16xf32> to vector<6x16x14xf32>
    %75 = vector.extract_strided_slice %63 {offsets = [0, 0, 0], sizes = [6, 16, 1], strides = [1, 1, 1]} : vector<6x16x16xf32> to vector<6x16x1xf32>
    %76 = tpu.concatenate %75, %75, %74 in 2 : vector<6x16x1xf32>, vector<6x16x1xf32>, vector<6x16x14xf32> -> vector<6x16x16xf32>
    %77 = arith.addf %73, %76 : vector<6x16x16xf32>
    %cst_18 = arith.constant 4.000000e-01 : f32
    %78 = vector.broadcast %cst_18 : f32 to vector<6x16x16xf32>
    %79 = arith.mulf %78, %63 : vector<6x16x16xf32>
    %cst_19 = arith.constant 2.500000e-01 : f32
    %80 = vector.broadcast %cst_19 : f32 to vector<6x16x16xf32>
    %81 = arith.mulf %80, %70 : vector<6x16x16xf32>
    %82 = arith.addf %79, %81 : vector<6x16x16xf32>
    %cst_20 = arith.constant 5.000000e-02 : f32
    %83 = vector.broadcast %cst_20 : f32 to vector<6x16x16xf32>
    %84 = arith.mulf %83, %77 : vector<6x16x16xf32>
    %85 = arith.addf %82, %84 : vector<6x16x16xf32>
    %cst_21 = arith.constant 4.000000e+00 : f32
    %86 = vector.broadcast %cst_21 : f32 to vector<6x16x16xf32>
    %87 = arith.mulf %85, %86 : vector<6x16x16xf32>
    %cst_22 = arith.constant 0.000000e+00 : f32
    %88 = vector.broadcast %cst_22 : f32 to vector<6x16x16xf32>
    %89 = arith.select %41, %87, %88 : vector<6x16x16xi1>, vector<6x16x16xf32>
    %90 = vector.extract_strided_slice %89 {offsets = [0, 1, 0], sizes = [6, 15, 16], strides = [1, 1, 1]} : vector<6x16x16xf32> to vector<6x15x16xf32>
    %91 = vector.extract_strided_slice %89 {offsets = [0, 15, 0], sizes = [6, 1, 16], strides = [1, 1, 1]} : vector<6x16x16xf32> to vector<6x1x16xf32>
    %92 = tpu.concatenate %90, %91 in 1 : vector<6x15x16xf32>, vector<6x1x16xf32> -> vector<6x16x16xf32>
    %93 = vector.extract_strided_slice %89 {offsets = [0, 0, 0], sizes = [6, 15, 16], strides = [1, 1, 1]} : vector<6x16x16xf32> to vector<6x15x16xf32>
    %94 = vector.extract_strided_slice %89 {offsets = [0, 0, 0], sizes = [6, 1, 16], strides = [1, 1, 1]} : vector<6x16x16xf32> to vector<6x1x16xf32>
    %95 = tpu.concatenate %94, %93 in 1 : vector<6x1x16xf32>, vector<6x15x16xf32> -> vector<6x16x16xf32>
    %96 = arith.addf %92, %95 : vector<6x16x16xf32>
    %97 = vector.extract_strided_slice %89 {offsets = [0, 2, 0], sizes = [6, 14, 16], strides = [1, 1, 1]} : vector<6x16x16xf32> to vector<6x14x16xf32>
    %98 = vector.extract_strided_slice %89 {offsets = [0, 15, 0], sizes = [6, 1, 16], strides = [1, 1, 1]} : vector<6x16x16xf32> to vector<6x1x16xf32>
    %99 = tpu.concatenate %97, %98, %98 in 1 : vector<6x14x16xf32>, vector<6x1x16xf32>, vector<6x1x16xf32> -> vector<6x16x16xf32>
    %100 = vector.extract_strided_slice %89 {offsets = [0, 0, 0], sizes = [6, 14, 16], strides = [1, 1, 1]} : vector<6x16x16xf32> to vector<6x14x16xf32>
    %101 = vector.extract_strided_slice %89 {offsets = [0, 0, 0], sizes = [6, 1, 16], strides = [1, 1, 1]} : vector<6x16x16xf32> to vector<6x1x16xf32>
    %102 = tpu.concatenate %101, %101, %100 in 1 : vector<6x1x16xf32>, vector<6x1x16xf32>, vector<6x14x16xf32> -> vector<6x16x16xf32>
    %103 = arith.addf %99, %102 : vector<6x16x16xf32>
    %cst_23 = arith.constant 4.000000e-01 : f32
    %104 = vector.broadcast %cst_23 : f32 to vector<6x16x16xf32>
    %105 = arith.mulf %104, %89 : vector<6x16x16xf32>
    %cst_24 = arith.constant 2.500000e-01 : f32
    %106 = vector.broadcast %cst_24 : f32 to vector<6x16x16xf32>
    %107 = arith.mulf %106, %96 : vector<6x16x16xf32>
    %108 = arith.addf %105, %107 : vector<6x16x16xf32>
    %cst_25 = arith.constant 5.000000e-02 : f32
    %109 = vector.broadcast %cst_25 : f32 to vector<6x16x16xf32>
    %110 = arith.mulf %109, %103 : vector<6x16x16xf32>
    %111 = arith.addf %108, %110 : vector<6x16x16xf32>
    %112 = vector.extract_strided_slice %111 {offsets = [0, 0, 1], sizes = [6, 16, 15], strides = [1, 1, 1]} : vector<6x16x16xf32> to vector<6x16x15xf32>
    %113 = vector.extract_strided_slice %111 {offsets = [0, 0, 15], sizes = [6, 16, 1], strides = [1, 1, 1]} : vector<6x16x16xf32> to vector<6x16x1xf32>
    %114 = tpu.concatenate %112, %113 in 2 : vector<6x16x15xf32>, vector<6x16x1xf32> -> vector<6x16x16xf32>
    %115 = vector.extract_strided_slice %111 {offsets = [0, 0, 0], sizes = [6, 16, 15], strides = [1, 1, 1]} : vector<6x16x16xf32> to vector<6x16x15xf32>
    %116 = vector.extract_strided_slice %111 {offsets = [0, 0, 0], sizes = [6, 16, 1], strides = [1, 1, 1]} : vector<6x16x16xf32> to vector<6x16x1xf32>
    %117 = tpu.concatenate %116, %115 in 2 : vector<6x16x1xf32>, vector<6x16x15xf32> -> vector<6x16x16xf32>
    %118 = arith.addf %114, %117 : vector<6x16x16xf32>
    %119 = vector.extract_strided_slice %111 {offsets = [0, 0, 2], sizes = [6, 16, 14], strides = [1, 1, 1]} : vector<6x16x16xf32> to vector<6x16x14xf32>
    %120 = vector.extract_strided_slice %111 {offsets = [0, 0, 15], sizes = [6, 16, 1], strides = [1, 1, 1]} : vector<6x16x16xf32> to vector<6x16x1xf32>
    %121 = tpu.concatenate %119, %120, %120 in 2 : vector<6x16x14xf32>, vector<6x16x1xf32>, vector<6x16x1xf32> -> vector<6x16x16xf32>
    %122 = vector.extract_strided_slice %111 {offsets = [0, 0, 0], sizes = [6, 16, 14], strides = [1, 1, 1]} : vector<6x16x16xf32> to vector<6x16x14xf32>
    %123 = vector.extract_strided_slice %111 {offsets = [0, 0, 0], sizes = [6, 16, 1], strides = [1, 1, 1]} : vector<6x16x16xf32> to vector<6x16x1xf32>
    %124 = tpu.concatenate %123, %123, %122 in 2 : vector<6x16x1xf32>, vector<6x16x1xf32>, vector<6x16x14xf32> -> vector<6x16x16xf32>
    %125 = arith.addf %121, %124 : vector<6x16x16xf32>
    %cst_26 = arith.constant 4.000000e-01 : f32
    %126 = vector.broadcast %cst_26 : f32 to vector<6x16x16xf32>
    %127 = arith.mulf %126, %111 : vector<6x16x16xf32>
    %cst_27 = arith.constant 2.500000e-01 : f32
    %128 = vector.broadcast %cst_27 : f32 to vector<6x16x16xf32>
    %129 = arith.mulf %128, %118 : vector<6x16x16xf32>
    %130 = arith.addf %127, %129 : vector<6x16x16xf32>
    %cst_28 = arith.constant 5.000000e-02 : f32
    %131 = vector.broadcast %cst_28 : f32 to vector<6x16x16xf32>
    %132 = arith.mulf %131, %125 : vector<6x16x16xf32>
    %133 = arith.addf %130, %132 : vector<6x16x16xf32>
    %134 = arith.subf %2, %133 : vector<6x16x16xf32>
    %135 = arith.mulf %134, %134 : vector<6x16x16xf32>
    %cst_29 = arith.constant 9.99999997E-7 : f32
    %136 = vector.broadcast %cst_29 : f32 to vector<6x16x16xf32>
    %137 = arith.addf %135, %136 : vector<6x16x16xf32>
    %138 = math.sqrt %137 : vector<6x16x16xf32>
    %cst_30 = arith.constant dense<0.000000e+00> : vector<16x16xf32>
    %139 = vector.multi_reduction <add>, %138, %cst_30 [0] : vector<6x16x16xf32> to vector<16x16xf32>
    %140 = vector.shape_cast %139 : vector<16x16xf32> to vector<1x16x16xf32>
    %cst_31 = arith.constant dense<0.000000e+00> : vector<1xf32>
    %141 = vector.multi_reduction <add>, %140, %cst_31 [1, 2] : vector<1x16x16xf32> to vector<1xf32>
    %142 = vector.shape_cast %141 : vector<1xf32> to vector<1x1x1xf32>
    %143 = vector.extract %142[0, 0, 0] : f32 from vector<1x1x1xf32>
    %144 = vector.broadcast %143 : f32 to vector<1x8x128xf32>
    %c0_32 = arith.constant 0 : index
    %c0_33 = arith.constant 0 : index
    %c0_34 = arith.constant 0 : index
    %145 = vector.load %arg3[%c0_32, %c0_33, %c0_34] : memref<1x8x128xf32, #tpu.memory_space<vmem>>, vector<1x8x128xf32>
    tpu.vector_store %arg3[%c0_32, %c0_33, %c0_34], %144 {strides = array<i32>} : memref<1x8x128xf32, #tpu.memory_space<vmem>>, vector<1x8x128xf32>,
    return
  }
  func.func @transform_0(%arg0: i32) -> (i32, i32, i32) {
    %c0_i32 = arith.constant 0 : i32
    %c0_i32_0 = arith.constant 0 : i32
    %c0_i32_1 = arith.constant 0 : i32
    return %arg0, %c0_i32, %c0_i32_0 : i32, i32, i32
  }
  func.func @transform_1(%arg0: i32) -> (i32, i32, i32) {
    %c0_i32 = arith.constant 0 : i32
    %c0_i32_0 = arith.constant 0 : i32
    %c0_i32_1 = arith.constant 0 : i32
    return %arg0, %c0_i32, %c0_i32_0 : i32, i32, i32
  }
  func.func @transform_2(%arg0: i32) -> (i32, i32, i32) {
    %c0_i32 = arith.constant 0 : i32
    %c0_i32_0 = arith.constant 0 : i32
    %c0_i32_1 = arith.constant 0 : i32
    return %arg0, %c0_i32, %c0_i32_0 : i32, i32, i32
  }
}

</mosaic_0001>

<llo_original>
// kernel: tpu_custom_call.1
$region0: #{tpu_custom_call.1}
  #allocation0 [shape = 'u32[]', space=smem, size = 0x4, offset = 0x4, fixed_abs, tag = 'smem constant byte address 0x4 - core index']
  #allocation1 [shape = 'u32[144,128]{1,0:T(1,128)}', space=vmem, size = 0x12000, scoped, tag = 'internal scratch']
  %s0 = inlined_call_operand.hbm [shape: f32[6,16,16], index: 0, kind: input, shape index: {}]
  %s1 = inlined_call_operand.hbm [shape: f32[6,16,16], index: 1, kind: input, shape index: {}]
  %s2 = inlined_call_operand.hbm [shape: f32[1,8,128], index: 2, kind: output, shape index: {}]
  %s3 = sld [smem:[#allocation0]]
  $region26: #{tpu_custom_call.1} parent=0
    _
  %s5 = ssub.s32 1, %s3
  %s6 = scalar_select 0, %s5, %s3
  $region1: #{tpu_custom_call.1} parent=0
    #allocation2 [shape = 'u8[49152]{0}', space=vmem, size = 0xc000, scoped, tag = 'input window, operand 0, single buffered']
    #allocation3 [shape = 's32[1]{0}', space=sflag, size = 0x4, scoped, tag = 'scoped memory for tpu_custom_call.1']
    #allocation4 [shape = 's32[1]{0}', space=sflag, size = 0x4, scoped, tag = 'scoped memory for tpu_custom_call.1']
    #allocation5 [shape = 'u8[49152]{0}', space=vmem, size = 0xc000, scoped, tag = 'input window, operand 1, single buffered']
    #allocation6 [shape = 's32[1]{0}', space=sflag, size = 0x4, scoped, tag = 'scoped memory for tpu_custom_call.1']
    #allocation7 [shape = 'u8[4096]{0}', space=vmem, size = 0x1000, scoped, tag = 'output window, operand 0, single buffered']
    %7 = vsyncpa [#allocation3], 0
    %8 = vsyncpa [#allocation6], 0
    %9 = vsyncpa [#allocation4], 0
    // Predicated region
    $region2: #{tpu_custom_call.1} parent=1 // pred_check
      _
    $region3: #{tpu_custom_call.1} parent=1 // pred_check_branch
      %11 = sbr.rel (0) target = $region5
    $region4: #{tpu_custom_call.1} parent=1 // pred_region
      %s13 = ssub.s32 1536, 1536
      %14 = vsyncadd [#allocation3], %s13
      %s15 = sshll.u32 [#allocation2], 4
      %s16 = int_to_ptr.vmem [resolvable:$true] %s15
      %21 = dma.hbm_to_vmem [thread:$0]  %s0, 1536, %s16, [#allocation3], 128, 128, 8
    $region5: #{tpu_custom_call.1} parent=1 // pred_fallthru
      _
    // Predicated region
    $region6: #{tpu_custom_call.1} parent=1 // pred_check
      _
    $region7: #{tpu_custom_call.1} parent=1 // pred_check_branch
      %23 = sbr.rel (0) target = $region9
    $region8: #{tpu_custom_call.1} parent=1 // pred_region
      %s25 = ssub.s32 1536, 1536
      %26 = vsyncadd [#allocation6], %s25
      %s27 = sshll.u32 [#allocation5], 4
      %s28 = int_to_ptr.vmem [resolvable:$true] %s27
      %33 = dma.hbm_to_vmem [thread:$0]  %s1, 1536, %s28, [#allocation6], 128, 128, 8
    $region9: #{tpu_custom_call.1} parent=1 // pred_fallthru
      _
    // Predicated region
    $region10: #{tpu_custom_call.1} parent=1 // pred_check
      _
    $region11: #{tpu_custom_call.1} parent=1 // pred_check_branch
      %35 = sbr.rel (0) target = $region13
    $region12: #{tpu_custom_call.1} parent=1 // pred_region
      %36 = dma.done [#allocation3], 1536
    $region13: #{tpu_custom_call.1} parent=1 // pred_fallthru
      _
    // Predicated region
    $region14: #{tpu_custom_call.1} parent=1 // pred_check
      _
    $region15: #{tpu_custom_call.1} parent=1 // pred_check_branch
      %38 = sbr.rel (0) target = $region17
    $region16: #{tpu_custom_call.1} parent=1 // pred_region
      %39 = dma.done [#allocation6], 1536
    $region17: #{tpu_custom_call.1} parent=1 // pred_fallthru
      _
    %v40 = vld [vmem:[#allocation2] sm:$0xff]
    %v41 = vld [vmem:[#allocation2 + $0x8] sm:$0xff]
    %v42 = vld [vmem:[#allocation2 + $0x10] sm:$0xff]
    %v43 = vld [vmem:[#allocation2 + $0x18] sm:$0xff]
    %v44 = vld [vmem:[#allocation2 + $0x20] sm:$0xff]
    %v45 = vld [vmem:[#allocation2 + $0x28] sm:$0xff]
    %v46 = vld [vmem:[#allocation2 + $0x30] sm:$0xff]
    %v47 = vld [vmem:[#allocation2 + $0x38] sm:$0xff]
    %v48 = vld [vmem:[#allocation2 + $0x40] sm:$0xff]
    %v49 = vld [vmem:[#allocation2 + $0x48] sm:$0xff]
    %v50 = vld [vmem:[#allocation2 + $0x50] sm:$0xff]
    %v51 = vld [vmem:[#allocation2 + $0x58] sm:$0xff]
    %v52 = vld [vmem:[#allocation5] sm:$0xff]
    %v53 = vld [vmem:[#allocation5 + $0x8] sm:$0xff]
    %v54 = vld [vmem:[#allocation5 + $0x10] sm:$0xff]
    %v55 = vld [vmem:[#allocation5 + $0x18] sm:$0xff]
    %v56 = vld [vmem:[#allocation5 + $0x20] sm:$0xff]
    %v57 = vld [vmem:[#allocation5 + $0x28] sm:$0xff]
    %v58 = vld [vmem:[#allocation5 + $0x30] sm:$0xff]
    %v59 = vld [vmem:[#allocation5 + $0x38] sm:$0xff]
    %v60 = vld [vmem:[#allocation5 + $0x40] sm:$0xff]
    %v61 = vld [vmem:[#allocation5 + $0x48] sm:$0xff]
    %v62 = vld [vmem:[#allocation5 + $0x50] sm:$0xff]
    %v63 = vld [vmem:[#allocation5 + $0x58] sm:$0xff]
    %v64 = vsub.f32 %v40, %v52
    %v65 = vsub.f32 %v41, %v53
    %v66 = vsub.f32 %v42, %v54
    %v67 = vsub.f32 %v43, %v55
    %v68 = vsub.f32 %v44, %v56
    %v69 = vsub.f32 %v45, %v57
    %v70 = vsub.f32 %v46, %v58
    %v71 = vsub.f32 %v47, %v59
    %v72 = vsub.f32 %v48, %v60
    %v73 = vsub.f32 %v49, %v61
    %v74 = vsub.f32 %v50, %v62
    %v75 = vsub.f32 %v51, %v63
    %v76 = vlaneseq
    %v77 = vshrl.u32 %v76, 7
    %v78 = vadd.s32 %v77, 8
    %v79 = vlaneseq
    %v80 = vand.u32 %v79, 127
    %vm81 = vcmp.lt.s32.totalorder %v77, 0
    %v82 = vsub.s32 0, %v77
    %v83 = vsel %vm81, %v82, %v77
    %v84 = vshrl.u32 %v83, 1
    %v85 = vand.u32 %v83, 1
    %v86 = vsub.s32 0, %v85
    %v87 = vsel %vm81, %v86, %v85
    %vm88 = vcmp.lt.s32.totalorder %v78, 0
    %v89 = vsub.s32 0, %v78
    %v90 = vsel %vm88, %v89, %v78
    %v91 = vshrl.u32 %v90, 1
    %v92 = vand.u32 %v90, 1
    %v93 = vsub.s32 0, %v92
    %v94 = vsel %vm88, %v93, %v92
    %vm95 = vcmp.ne.s32.totalorder %v87, 0
    %vm96 = vcmp.ne.s32.totalorder %v94, 0
    %vm97 = vcmp.lt.s32.totalorder %v87, 0
    %vm98 = vcmp.lt.s32.totalorder %v94, 0
    %vm99 = vmand %vm97, %vm95
    %vm100 = vmand %vm98, %vm96
    %v101 = vadd.s32 %v87, 2
    %v102 = vadd.s32 %v94, 2
    %v103 = vsel %vm99, %v101, %v87
    %v104 = vsel %vm100, %v102, %v94
    %vm105 = vcmp.eq.s32.totalorder %v103, 0
    %vm106 = vcmp.eq.s32.totalorder %v104, 0
    %vm107 = vcmp.lt.s32.totalorder %v80, 0
    %v108 = vsub.s32 0, %v80
    %v109 = vsel %vm107, %v108, %v80
    %v110 = vshrl.u32 %v109, 1
    %v111 = vand.u32 %v109, 1
    %v112 = vsub.s32 0, %v111
    %v113 = vsel %vm107, %v112, %v111
    %vm114 = vcmp.ne.s32.totalorder %v113, 0
    %vm115 = vcmp.lt.s32.totalorder %v113, 0
    %vm116 = vmand %vm115, %vm114
    %v117 = vadd.s32 %v113, 2
    %v118 = vsel %vm116, %v117, %v113
    %vm119 = vcmp.eq.s32.totalorder %v118, 0
    %vm120 = vmand %vm105, %vm119
    %vm121 = vmand %vm106, %vm119
    %vm134 = vcmask 1046528
    %v135 = vrot.slane %v64, 1
    %v136 = vrot.slane %v65, 1
    %v137 = vsel %vm134, %v135, %v136
    %v138 = vrot.slane %v66, 1
    %v139 = vrot.slane %v67, 1
    %v140 = vsel %vm134, %v138, %v139
    %v141 = vrot.slane %v68, 1
    %v142 = vrot.slane %v69, 1
    %v143 = vsel %vm134, %v141, %v142
    %v144 = vrot.slane %v70, 1
    %v145 = vrot.slane %v71, 1
    %v146 = vsel %vm134, %v144, %v145
    %v147 = vrot.slane %v72, 1
    %v148 = vrot.slane %v73, 1
    %v149 = vsel %vm134, %v147, %v148
    %v150 = vrot.slane %v74, 1
    %v151 = vrot.slane %v75, 1
    %v152 = vsel %vm134, %v150, %v151
    %v165 = vsel %vm134, %v136, %v65
    %v166 = vsel %vm134, %v139, %v67
    %v167 = vsel %vm134, %v142, %v69
    %v168 = vsel %vm134, %v145, %v71
    %v169 = vsel %vm134, %v148, %v73
    %v170 = vsel %vm134, %v151, %v75
    %vm171 = vcmask 1040384
    %v172 = vrot.slane %v64, 7
    %v173 = vrot.slane %v65, 7
    %v174 = vsel %vm171, %v172, %v173
    %v175 = vrot.slane %v66, 7
    %v176 = vrot.slane %v67, 7
    %v177 = vsel %vm171, %v175, %v176
    %v178 = vrot.slane %v68, 7
    %v179 = vrot.slane %v69, 7
    %v180 = vsel %vm171, %v178, %v179
    %v181 = vrot.slane %v70, 7
    %v182 = vrot.slane %v71, 7
    %v183 = vsel %vm171, %v181, %v182
    %v184 = vrot.slane %v72, 7
    %v185 = vrot.slane %v73, 7
    %v186 = vsel %vm171, %v184, %v185
    %v187 = vrot.slane %v74, 7
    %v188 = vrot.slane %v75, 7
    %v189 = vsel %vm171, %v187, %v188
    %v202 = vsel %vm171, %v64, %v172
    %v203 = vsel %vm171, %v66, %v175
    %v204 = vsel %vm171, %v68, %v178
    %v205 = vsel %vm171, %v70, %v181
    %v206 = vsel %vm171, %v72, %v184
    %v207 = vsel %vm171, %v74, %v187
    %v208 = vadd.f32 %v137, %v202
    %v209 = vadd.f32 %v165, %v174
    %v210 = vadd.f32 %v140, %v203
    %v211 = vadd.f32 %v166, %v177
    %v212 = vadd.f32 %v143, %v204
    %v213 = vadd.f32 %v167, %v180
    %v214 = vadd.f32 %v146, %v205
    %v215 = vadd.f32 %v168, %v183
    %v216 = vadd.f32 %v149, %v206
    %v217 = vadd.f32 %v169, %v186
    %v218 = vadd.f32 %v152, %v207
    %v219 = vadd.f32 %v170, %v189
    %vm220 = vcmask 1045504
    %v221 = vrot.slane %v64, 2
    %v222 = vrot.slane %v65, 2
    %v223 = vsel %vm220, %v221, %v222
    %v224 = vrot.slane %v66, 2
    %v225 = vrot.slane %v67, 2
    %v226 = vsel %vm220, %v224, %v225
    %v227 = vrot.slane %v68, 2
    %v228 = vrot.slane %v69, 2
    %v229 = vsel %vm220, %v227, %v228
    %v230 = vrot.slane %v70, 2
    %v231 = vrot.slane %v71, 2
    %v232 = vsel %vm220, %v230, %v231
    %v233 = vrot.slane %v72, 2
    %v234 = vrot.slane %v73, 2
    %v235 = vsel %vm220, %v233, %v234
    %v236 = vrot.slane %v74, 2
    %v237 = vrot.slane %v75, 2
    %v238 = vsel %vm220, %v236, %v237
    %v251 = vsel %vm220, %v222, %v136
    %v252 = vsel %vm220, %v225, %v139
    %v253 = vsel %vm220, %v228, %v142
    %v254 = vsel %vm220, %v231, %v145
    %v255 = vsel %vm220, %v234, %v148
    %v256 = vsel %vm220, %v237, %v151
    %v257 = vsel %vm134, %v251, %v65
    %v258 = vsel %vm134, %v252, %v67
    %v259 = vsel %vm134, %v253, %v69
    %v260 = vsel %vm134, %v254, %v71
    %v261 = vsel %vm134, %v255, %v73
    %v262 = vsel %vm134, %v256, %v75
    %vm263 = vcmask 1041408
    %v264 = vrot.slane %v64, 6
    %v265 = vrot.slane %v65, 6
    %v266 = vsel %vm263, %v264, %v265
    %v267 = vrot.slane %v66, 6
    %v268 = vrot.slane %v67, 6
    %v269 = vsel %vm263, %v267, %v268
    %v270 = vrot.slane %v68, 6
    %v271 = vrot.slane %v69, 6
    %v272 = vsel %vm263, %v270, %v271
    %v273 = vrot.slane %v70, 6
    %v274 = vrot.slane %v71, 6
    %v275 = vsel %vm263, %v273, %v274
    %v276 = vrot.slane %v72, 6
    %v277 = vrot.slane %v73, 6
    %v278 = vsel %vm263, %v276, %v277
    %v279 = vrot.slane %v74, 6
    %v280 = vrot.slane %v75, 6
    %v281 = vsel %vm263, %v279, %v280
    %v294 = vsel %vm263, %v202, %v264
    %v295 = vsel %vm263, %v203, %v267
    %v296 = vsel %vm263, %v204, %v270
    %v297 = vsel %vm263, %v205, %v273
    %v298 = vsel %vm263, %v206, %v276
    %v299 = vsel %vm263, %v207, %v279
    %v300 = vadd.f32 %v223, %v294
    %v301 = vadd.f32 %v257, %v266
    %v302 = vadd.f32 %v226, %v295
    %v303 = vadd.f32 %v258, %v269
    %v304 = vadd.f32 %v229, %v296
    %v305 = vadd.f32 %v259, %v272
    %v306 = vadd.f32 %v232, %v297
    %v307 = vadd.f32 %v260, %v275
    %v308 = vadd.f32 %v235, %v298
    %v309 = vadd.f32 %v261, %v278
    %v310 = vadd.f32 %v238, %v299
    %v311 = vadd.f32 %v262, %v281
    %v312 = vmul.f32 %v64, 0.4
    %v313 = vmul.f32 %v65, 0.4
    %v314 = vmul.f32 %v66, 0.4
    %v315 = vmul.f32 %v67, 0.4
    %v316 = vmul.f32 %v68, 0.4
    %v317 = vmul.f32 %v69, 0.4
    %v318 = vmul.f32 %v70, 0.4
    %v319 = vmul.f32 %v71, 0.4
    %v320 = vmul.f32 %v72, 0.4
    %v321 = vmul.f32 %v73, 0.4
    %v322 = vmul.f32 %v74, 0.4
    %v323 = vmul.f32 %v75, 0.4
    %v324 = vmul.f32 %v208, 0.25
    %v325 = vmul.f32 %v209, 0.25
    %v326 = vmul.f32 %v210, 0.25
    %v327 = vmul.f32 %v211, 0.25
    %v328 = vmul.f32 %v212, 0.25
    %v329 = vmul.f32 %v213, 0.25
    %v330 = vmul.f32 %v214, 0.25
    %v331 = vmul.f32 %v215, 0.25
    %v332 = vmul.f32 %v216, 0.25
    %v333 = vmul.f32 %v217, 0.25
    %v334 = vmul.f32 %v218, 0.25
    %v335 = vmul.f32 %v219, 0.25
    %v336 = vadd.f32 %v312, %v324
    %v337 = vadd.f32 %v313, %v325
    %v338 = vadd.f32 %v314, %v326
    %v339 = vadd.f32 %v315, %v327
    %v340 = vadd.f32 %v316, %v328
    %v341 = vadd.f32 %v317, %v329
    %v342 = vadd.f32 %v318, %v330
    %v343 = vadd.f32 %v319, %v331
    %v344 = vadd.f32 %v320, %v332
    %v345 = vadd.f32 %v321, %v333
    %v346 = vadd.f32 %v322, %v334
    %v347 = vadd.f32 %v323, %v335
    %v348 = vmul.f32 %v300, 0.05
    %v349 = vmul.f32 %v301, 0.05
    %v350 = vmul.f32 %v302, 0.05
    %v351 = vmul.f32 %v303, 0.05
    %v352 = vmul.f32 %v304, 0.05
    %v353 = vmul.f32 %v305, 0.05
    %v354 = vmul.f32 %v306, 0.05
    %v355 = vmul.f32 %v307, 0.05
    %v356 = vmul.f32 %v308, 0.05
    %v357 = vmul.f32 %v309, 0.05
    %v358 = vmul.f32 %v310, 0.05
    %v359 = vmul.f32 %v311, 0.05
    %v360 = vadd.f32 %v336, %v348
    %v361 = vadd.f32 %v337, %v349
    %v362 = vadd.f32 %v338, %v350
    %v363 = vadd.f32 %v339, %v351
    %v364 = vadd.f32 %v340, %v352
    %v365 = vadd.f32 %v341, %v353
    %v366 = vadd.f32 %v342, %v354
    %v367 = vadd.f32 %v343, %v355
    %v368 = vadd.f32 %v344, %v356
    %v369 = vadd.f32 %v345, %v357
    %v370 = vadd.f32 %v346, %v358
    %v371 = vadd.f32 %v347, %v359
    %384 = vrot.lane.b32.xlu0 %v360, 127
    %v385 = vpop.permute.xlu0 %384
    %386 = vrot.lane.b32.xlu0 %v361, 127
    %v387 = vpop.permute.xlu0 %386
    %388 = vrot.lane.b32.xlu0 %v362, 127
    %v389 = vpop.permute.xlu0 %388
    %390 = vrot.lane.b32.xlu0 %v363, 127
    %v391 = vpop.permute.xlu0 %390
    %392 = vrot.lane.b32.xlu0 %v364, 127
    %v393 = vpop.permute.xlu0 %392
    %394 = vrot.lane.b32.xlu0 %v365, 127
    %v395 = vpop.permute.xlu0 %394
    %396 = vrot.lane.b32.xlu0 %v366, 127
    %v397 = vpop.permute.xlu0 %396
    %398 = vrot.lane.b32.xlu0 %v367, 127
    %v399 = vpop.permute.xlu0 %398
    %400 = vrot.lane.b32.xlu0 %v368, 127
    %v401 = vpop.permute.xlu0 %400
    %402 = vrot.lane.b32.xlu0 %v369, 127
    %v403 = vpop.permute.xlu0 %402
    %404 = vrot.lane.b32.xlu0 %v370, 127
    %v405 = vpop.permute.xlu0 %404
    %406 = vrot.lane.b32.xlu0 %v371, 127
    %v407 = vpop.permute.xlu0 %406
    %vm420 = vcmask 121856
    %v421 = vsel %vm420, %v385, %v360
    %v422 = vsel %vm420, %v387, %v361
    %v423 = vsel %vm420, %v389, %v362
    %v424 = vsel %vm420, %v391, %v363
    %v425 = vsel %vm420, %v393, %v364
    %v426 = vsel %vm420, %v395, %v365
    %v427 = vsel %vm420, %v397, %v366
    %v428 = vsel %vm420, %v399, %v367
    %v429 = vsel %vm420, %v401, %v368
    %v430 = vsel %vm420, %v403, %v369
    %v431 = vsel %vm420, %v405, %v370
    %v432 = vsel %vm420, %v407, %v371
    %433 = vrot.lane.b32.xlu0 %v360, 1
    %v434 = vpop.permute.xlu0 %433
    %435 = vrot.lane.b32.xlu0 %v361, 1
    %v436 = vpop.permute.xlu0 %435
    %437 = vrot.lane.b32.xlu0 %v362, 1
    %v438 = vpop.permute.xlu0 %437
    %439 = vrot.lane.b32.xlu0 %v363, 1
    %v440 = vpop.permute.xlu0 %439
    %441 = vrot.lane.b32.xlu0 %v364, 1
    %v442 = vpop.permute.xlu0 %441
    %443 = vrot.lane.b32.xlu0 %v365, 1
    %v444 = vpop.permute.xlu0 %443
    %445 = vrot.lane.b32.xlu0 %v366, 1
    %v446 = vpop.permute.xlu0 %445
    %447 = vrot.lane.b32.xlu0 %v367, 1
    %v448 = vpop.permute.xlu0 %447
    %449 = vrot.lane.b32.xlu0 %v368, 1
    %v450 = vpop.permute.xlu0 %449
    %451 = vrot.lane.b32.xlu0 %v369, 1
    %v452 = vpop.permute.xlu0 %451
    %453 = vrot.lane.b32.xlu0 %v370, 1
    %v454 = vpop.permute.xlu0 %453
    %455 = vrot.lane.b32.xlu0 %v371, 1
    %v456 = vpop.permute.xlu0 %455
    %vm469 = vcmask 7168
    %v470 = vsel %vm469, %v360, %v434
    %v471 = vsel %vm469, %v361, %v436
    %v472 = vsel %vm469, %v362, %v438
    %v473 = vsel %vm469, %v363, %v440
    %v474 = vsel %vm469, %v364, %v442
    %v475 = vsel %vm469, %v365, %v444
    %v476 = vsel %vm469, %v366, %v446
    %v477 = vsel %vm469, %v367, %v448
    %v478 = vsel %vm469, %v368, %v450
    %v479 = vsel %vm469, %v369, %v452
    %v480 = vsel %vm469, %v370, %v454
    %v481 = vsel %vm469, %v371, %v456
    %v482 = vadd.f32 %v421, %v470
    %v483 = vadd.f32 %v422, %v471
    %v484 = vadd.f32 %v423, %v472
    %v485 = vadd.f32 %v424, %v473
    %v486 = vadd.f32 %v425, %v474
    %v487 = vadd.f32 %v426, %v475
    %v488 = vadd.f32 %v427, %v476
    %v489 = vadd.f32 %v428, %v477
    %v490 = vadd.f32 %v429, %v478
    %v491 = vadd.f32 %v430, %v479
    %v492 = vadd.f32 %v431, %v480
    %v493 = vadd.f32 %v432, %v481
    %494 = vrot.lane.b32.xlu0 %v360, 126
    %v495 = vpop.permute.xlu0 %494
    %496 = vrot.lane.b32.xlu0 %v361, 126
    %v497 = vpop.permute.xlu0 %496
    %498 = vrot.lane.b32.xlu0 %v362, 126
    %v499 = vpop.permute.xlu0 %498
    %500 = vrot.lane.b32.xlu0 %v363, 126
    %v501 = vpop.permute.xlu0 %500
    %502 = vrot.lane.b32.xlu0 %v364, 126
    %v503 = vpop.permute.xlu0 %502
    %504 = vrot.lane.b32.xlu0 %v365, 126
    %v505 = vpop.permute.xlu0 %504
    %506 = vrot.lane.b32.xlu0 %v366, 126
    %v507 = vpop.permute.xlu0 %506
    %508 = vrot.lane.b32.xlu0 %v367, 126
    %v509 = vpop.permute.xlu0 %508
    %510 = vrot.lane.b32.xlu0 %v368, 126
    %v511 = vpop.permute.xlu0 %510
    %512 = vrot.lane.b32.xlu0 %v369, 126
    %v513 = vpop.permute.xlu0 %512
    %514 = vrot.lane.b32.xlu0 %v370, 126
    %v515 = vpop.permute.xlu0 %514
    %516 = vrot.lane.b32.xlu0 %v371, 126
    %v517 = vpop.permute.xlu0 %516
    %vm530 = vcmask 113664
    %v531 = vsel %vm530, %v495, %v385
    %v532 = vsel %vm530, %v497, %v387
    %v533 = vsel %vm530, %v499, %v389
    %v534 = vsel %vm530, %v501, %v391
    %v535 = vsel %vm530, %v503, %v393
    %v536 = vsel %vm530, %v505, %v395
    %v537 = vsel %vm530, %v507, %v397
    %v538 = vsel %vm530, %v509, %v399
    %v539 = vsel %vm530, %v511, %v401
    %v540 = vsel %vm530, %v513, %v403
    %v541 = vsel %vm530, %v515, %v405
    %v542 = vsel %vm530, %v517, %v407
    %v543 = vsel %vm420, %v531, %v360
    %v544 = vsel %vm420, %v532, %v361
    %v545 = vsel %vm420, %v533, %v362
    %v546 = vsel %vm420, %v534, %v363
    %v547 = vsel %vm420, %v535, %v364
    %v548 = vsel %vm420, %v536, %v365
    %v549 = vsel %vm420, %v537, %v366
    %v550 = vsel %vm420, %v538, %v367
    %v551 = vsel %vm420, %v539, %v368
    %v552 = vsel %vm420, %v540, %v369
    %v553 = vsel %vm420, %v541, %v370
    %v554 = vsel %vm420, %v542, %v371
    %555 = vrot.lane.b32.xlu0 %v360, 2
    %v556 = vpop.permute.xlu0 %555
    %557 = vrot.lane.b32.xlu0 %v361, 2
    %v558 = vpop.permute.xlu0 %557
    %559 = vrot.lane.b32.xlu0 %v362, 2
    %v560 = vpop.permute.xlu0 %559
    %561 = vrot.lane.b32.xlu0 %v363, 2
    %v562 = vpop.permute.xlu0 %561
    %563 = vrot.lane.b32.xlu0 %v364, 2
    %v564 = vpop.permute.xlu0 %563
    %565 = vrot.lane.b32.xlu0 %v365, 2
    %v566 = vpop.permute.xlu0 %565
    %567 = vrot.lane.b32.xlu0 %v366, 2
    %v568 = vpop.permute.xlu0 %567
    %569 = vrot.lane.b32.xlu0 %v367, 2
    %v570 = vpop.permute.xlu0 %569
    %571 = vrot.lane.b32.xlu0 %v368, 2
    %v572 = vpop.permute.xlu0 %571
    %573 = vrot.lane.b32.xlu0 %v369, 2
    %v574 = vpop.permute.xlu0 %573
    %575 = vrot.lane.b32.xlu0 %v370, 2
    %v576 = vpop.permute.xlu0 %575
    %577 = vrot.lane.b32.xlu0 %v371, 2
    %v578 = vpop.permute.xlu0 %577
    %vm591 = vcmask 15360
    %v592 = vsel %vm591, %v470, %v556
    %v593 = vsel %vm591, %v471, %v558
    %v594 = vsel %vm591, %v472, %v560
    %v595 = vsel %vm591, %v473, %v562
    %v596 = vsel %vm591, %v474, %v564
    %v597 = vsel %vm591, %v475, %v566
    %v598 = vsel %vm591, %v476, %v568
    %v599 = vsel %vm591, %v477, %v570
    %v600 = vsel %vm591, %v478, %v572
    %v601 = vsel %vm591, %v479, %v574
    %v602 = vsel %vm591, %v480, %v576
    %v603 = vsel %vm591, %v481, %v578
    %v604 = vadd.f32 %v543, %v592
    %v605 = vadd.f32 %v544, %v593
    %v606 = vadd.f32 %v545, %v594
    %v607 = vadd.f32 %v546, %v595
    %v608 = vadd.f32 %v547, %v596
    %v609 = vadd.f32 %v548, %v597
    %v610 = vadd.f32 %v549, %v598
    %v611 = vadd.f32 %v550, %v599
    %v612 = vadd.f32 %v551, %v600
    %v613 = vadd.f32 %v552, %v601
    %v614 = vadd.f32 %v553, %v602
    %v615 = vadd.f32 %v554, %v603
    %v616 = vmul.f32 %v360, 0.4
    %v617 = vmul.f32 %v361, 0.4
    %v618 = vmul.f32 %v362, 0.4
    %v619 = vmul.f32 %v363, 0.4
    %v620 = vmul.f32 %v364, 0.4
    %v621 = vmul.f32 %v365, 0.4
    %v622 = vmul.f32 %v366, 0.4
    %v623 = vmul.f32 %v367, 0.4
    %v624 = vmul.f32 %v368, 0.4
    %v625 = vmul.f32 %v369, 0.4
    %v626 = vmul.f32 %v370, 0.4
    %v627 = vmul.f32 %v371, 0.4
    %v628 = vmul.f32 %v482, 0.25
    %v629 = vmul.f32 %v483, 0.25
    %v630 = vmul.f32 %v484, 0.25
    %v631 = vmul.f32 %v485, 0.25
    %v632 = vmul.f32 %v486, 0.25
    %v633 = vmul.f32 %v487, 0.25
    %v634 = vmul.f32 %v488, 0.25
    %v635 = vmul.f32 %v489, 0.25
    %v636 = vmul.f32 %v490, 0.25
    %v637 = vmul.f32 %v491, 0.25
    %v638 = vmul.f32 %v492, 0.25
    %v639 = vmul.f32 %v493, 0.25
    %v640 = vadd.f32 %v616, %v628
    %v641 = vadd.f32 %v617, %v629
    %v642 = vadd.f32 %v618, %v630
    %v643 = vadd.f32 %v619, %v631
    %v644 = vadd.f32 %v620, %v632
    %v645 = vadd.f32 %v621, %v633
    %v646 = vadd.f32 %v622, %v634
    %v647 = vadd.f32 %v623, %v635
    %v648 = vadd.f32 %v624, %v636
    %v649 = vadd.f32 %v625, %v637
    %v650 = vadd.f32 %v626, %v638
    %v651 = vadd.f32 %v627, %v639
    %v652 = vmul.f32 %v604, 0.05
    %v653 = vmul.f32 %v605, 0.05
    %v654 = vmul.f32 %v606, 0.05
    %v655 = vmul.f32 %v607, 0.05
    %v656 = vmul.f32 %v608, 0.05
    %v657 = vmul.f32 %v609, 0.05
    %v658 = vmul.f32 %v610, 0.05
    %v659 = vmul.f32 %v611, 0.05
    %v660 = vmul.f32 %v612, 0.05
    %v661 = vmul.f32 %v613, 0.05
    %v662 = vmul.f32 %v614, 0.05
    %v663 = vmul.f32 %v615, 0.05
    %v664 = vadd.f32 %v640, %v652
    %v665 = vadd.f32 %v641, %v653
    %v666 = vadd.f32 %v642, %v654
    %v667 = vadd.f32 %v643, %v655
    %v668 = vadd.f32 %v644, %v656
    %v669 = vadd.f32 %v645, %v657
    %v670 = vadd.f32 %v646, %v658
    %v671 = vadd.f32 %v647, %v659
    %v672 = vadd.f32 %v648, %v660
    %v673 = vadd.f32 %v649, %v661
    %v674 = vadd.f32 %v650, %v662
    %v675 = vadd.f32 %v651, %v663
    %v676 = vmul.f32 %v664, 4.0
    %v677 = vmul.f32 %v665, 4.0
    %v678 = vmul.f32 %v666, 4.0
    %v679 = vmul.f32 %v667, 4.0
    %v680 = vmul.f32 %v668, 4.0
    %v681 = vmul.f32 %v669, 4.0
    %v682 = vmul.f32 %v670, 4.0
    %v683 = vmul.f32 %v671, 4.0
    %v684 = vmul.f32 %v672, 4.0
    %v685 = vmul.f32 %v673, 4.0
    %v686 = vmul.f32 %v674, 4.0
    %v687 = vmul.f32 %v675, 4.0
    %v688 = vsel %vm120, %v676, 0.0
    %v689 = vsel %vm121, %v677, 0.0
    %v690 = vsel %vm120, %v678, 0.0
    %v691 = vsel %vm121, %v679, 0.0
    %v692 = vsel %vm120, %v680, 0.0
    %v693 = vsel %vm121, %v681, 0.0
    %v694 = vsel %vm120, %v682, 0.0
    %v695 = vsel %vm121, %v683, 0.0
    %v696 = vsel %vm120, %v684, 0.0
    %v697 = vsel %vm121, %v685, 0.0
    %v698 = vsel %vm120, %v686, 0.0
    %v699 = vsel %vm121, %v687, 0.0
    %v712 = vrot.slane %v688, 1
    %v713 = vrot.slane %v689, 1
    %v714 = vsel %vm134, %v712, %v713
    %v715 = vrot.slane %v690, 1
    %v716 = vrot.slane %v691, 1
    %v717 = vsel %vm134, %v715, %v716
    %v718 = vrot.slane %v692, 1
    %v719 = vrot.slane %v693, 1
    %v720 = vsel %vm134, %v718, %v719
    %v721 = vrot.slane %v694, 1
    %v722 = vrot.slane %v695, 1
    %v723 = vsel %vm134, %v721, %v722
    %v724 = vrot.slane %v696, 1
    %v725 = vrot.slane %v697, 1
    %v726 = vsel %vm134, %v724, %v725
    %v727 = vrot.slane %v698, 1
    %v728 = vrot.slane %v699, 1
    %v729 = vsel %vm134, %v727, %v728
    %v742 = vsel %vm134, %v713, %v689
    %v743 = vsel %vm134, %v716, %v691
    %v744 = vsel %vm134, %v719, %v693
    %v745 = vsel %vm134, %v722, %v695
    %v746 = vsel %vm134, %v725, %v697
    %v747 = vsel %vm134, %v728, %v699
    %v748 = vrot.slane %v688, 7
    %v749 = vrot.slane %v689, 7
    %v750 = vsel %vm171, %v748, %v749
    %v751 = vrot.slane %v690, 7
    %v752 = vrot.slane %v691, 7
    %v753 = vsel %vm171, %v751, %v752
    %v754 = vrot.slane %v692, 7
    %v755 = vrot.slane %v693, 7
    %v756 = vsel %vm171, %v754, %v755
    %v757 = vrot.slane %v694, 7
    %v758 = vrot.slane %v695, 7
    %v759 = vsel %vm171, %v757, %v758
    %v760 = vrot.slane %v696, 7
    %v761 = vrot.slane %v697, 7
    %v762 = vsel %vm171, %v760, %v761
    %v763 = vrot.slane %v698, 7
    %v764 = vrot.slane %v699, 7
    %v765 = vsel %vm171, %v763, %v764
    %v778 = vsel %vm171, %v688, %v748
    %v779 = vsel %vm171, %v690, %v751
    %v780 = vsel %vm171, %v692, %v754
    %v781 = vsel %vm171, %v694, %v757
    %v782 = vsel %vm171, %v696, %v760
    %v783 = vsel %vm171, %v698, %v763
    %v784 = vadd.f32 %v714, %v778
    %v785 = vadd.f32 %v742, %v750
    %v786 = vadd.f32 %v717, %v779
    %v787 = vadd.f32 %v743, %v753
    %v788 = vadd.f32 %v720, %v780
    %v789 = vadd.f32 %v744, %v756
    %v790 = vadd.f32 %v723, %v781
    %v791 = vadd.f32 %v745, %v759
    %v792 = vadd.f32 %v726, %v782
    %v793 = vadd.f32 %v746, %v762
    %v794 = vadd.f32 %v729, %v783
    %v795 = vadd.f32 %v747, %v765
    %v796 = vrot.slane %v688, 2
    %v797 = vrot.slane %v689, 2
    %v798 = vsel %vm220, %v796, %v797
    %v799 = vrot.slane %v690, 2
    %v800 = vrot.slane %v691, 2
    %v801 = vsel %vm220, %v799, %v800
    %v802 = vrot.slane %v692, 2
    %v803 = vrot.slane %v693, 2
    %v804 = vsel %vm220, %v802, %v803
    %v805 = vrot.slane %v694, 2
    %v806 = vrot.slane %v695, 2
    %v807 = vsel %vm220, %v805, %v806
    %v808 = vrot.slane %v696, 2
    %v809 = vrot.slane %v697, 2
    %v810 = vsel %vm220, %v808, %v809
    %v811 = vrot.slane %v698, 2
    %v812 = vrot.slane %v699, 2
    %v813 = vsel %vm220, %v811, %v812
    %v826 = vsel %vm220, %v797, %v713
    %v827 = vsel %vm220, %v800, %v716
    %v828 = vsel %vm220, %v803, %v719
    %v829 = vsel %vm220, %v806, %v722
    %v830 = vsel %vm220, %v809, %v725
    %v831 = vsel %vm220, %v812, %v728
    %v832 = vsel %vm134, %v826, %v689
    %v833 = vsel %vm134, %v827, %v691
    %v834 = vsel %vm134, %v828, %v693
    %v835 = vsel %vm134, %v829, %v695
    %v836 = vsel %vm134, %v830, %v697
    %v837 = vsel %vm134, %v831, %v699
    %v838 = vrot.slane %v688, 6
    %v839 = vrot.slane %v689, 6
    %v840 = vsel %vm263, %v838, %v839
    %v841 = vrot.slane %v690, 6
    %v842 = vrot.slane %v691, 6
    %v843 = vsel %vm263, %v841, %v842
    %v844 = vrot.slane %v692, 6
    %v845 = vrot.slane %v693, 6
    %v846 = vsel %vm263, %v844, %v845
    %v847 = vrot.slane %v694, 6
    %v848 = vrot.slane %v695, 6
    %v849 = vsel %vm263, %v847, %v848
    %v850 = vrot.slane %v696, 6
    %v851 = vrot.slane %v697, 6
    %v852 = vsel %vm263, %v850, %v851
    %v853 = vrot.slane %v698, 6
    %v854 = vrot.slane %v699, 6
    %v855 = vsel %vm263, %v853, %v854
    %v868 = vsel %vm263, %v778, %v838
    %v869 = vsel %vm263, %v779, %v841
    %v870 = vsel %vm263, %v780, %v844
    %v871 = vsel %vm263, %v781, %v847
    %v872 = vsel %vm263, %v782, %v850
    %v873 = vsel %vm263, %v783, %v853
    %v874 = vadd.f32 %v798, %v868
    %v875 = vadd.f32 %v832, %v840
    %v876 = vadd.f32 %v801, %v869
    %v877 = vadd.f32 %v833, %v843
    %v878 = vadd.f32 %v804, %v870
    %v879 = vadd.f32 %v834, %v846
    %v880 = vadd.f32 %v807, %v871
    %v881 = vadd.f32 %v835, %v849
    %v882 = vadd.f32 %v810, %v872
    %v883 = vadd.f32 %v836, %v852
    %v884 = vadd.f32 %v813, %v873
    %v885 = vadd.f32 %v837, %v855
    %v886 = vmul.f32 %v688, 0.4
    %v887 = vmul.f32 %v689, 0.4
    %v888 = vmul.f32 %v690, 0.4
    %v889 = vmul.f32 %v691, 0.4
    %v890 = vmul.f32 %v692, 0.4
    %v891 = vmul.f32 %v693, 0.4
    %v892 = vmul.f32 %v694, 0.4
    %v893 = vmul.f32 %v695, 0.4
    %v894 = vmul.f32 %v696, 0.4
    %v895 = vmul.f32 %v697, 0.4
    %v896 = vmul.f32 %v698, 0.4
    %v897 = vmul.f32 %v699, 0.4
    %v898 = vmul.f32 %v784, 0.25
    %v899 = vmul.f32 %v785, 0.25
    %v900 = vmul.f32 %v786, 0.25
    %v901 = vmul.f32 %v787, 0.25
    %v902 = vmul.f32 %v788, 0.25
    %v903 = vmul.f32 %v789, 0.25
    %v904 = vmul.f32 %v790, 0.25
    %v905 = vmul.f32 %v791, 0.25
    %v906 = vmul.f32 %v792, 0.25
    %v907 = vmul.f32 %v793, 0.25
    %v908 = vmul.f32 %v794, 0.25
    %v909 = vmul.f32 %v795, 0.25
    %v910 = vadd.f32 %v886, %v898
    %v911 = vadd.f32 %v887, %v899
    %v912 = vadd.f32 %v888, %v900
    %v913 = vadd.f32 %v889, %v901
    %v914 = vadd.f32 %v890, %v902
    %v915 = vadd.f32 %v891, %v903
    %v916 = vadd.f32 %v892, %v904
    %v917 = vadd.f32 %v893, %v905
    %v918 = vadd.f32 %v894, %v906
    %v919 = vadd.f32 %v895, %v907
    %v920 = vadd.f32 %v896, %v908
    %v921 = vadd.f32 %v897, %v909
    %v922 = vmul.f32 %v874, 0.05
    %v923 = vmul.f32 %v875, 0.05
    %v924 = vmul.f32 %v876, 0.05
    %v925 = vmul.f32 %v877, 0.05
    %v926 = vmul.f32 %v878, 0.05
    %v927 = vmul.f32 %v879, 0.05
    %v928 = vmul.f32 %v880, 0.05
    %v929 = vmul.f32 %v881, 0.05
    %v930 = vmul.f32 %v882, 0.05
    %v931 = vmul.f32 %v883, 0.05
    %v932 = vmul.f32 %v884, 0.05
    %v933 = vmul.f32 %v885, 0.05
    %v934 = vadd.f32 %v910, %v922
    %v935 = vadd.f32 %v911, %v923
    %v936 = vadd.f32 %v912, %v924
    %v937 = vadd.f32 %v913, %v925
    %v938 = vadd.f32 %v914, %v926
    %v939 = vadd.f32 %v915, %v927
    %v940 = vadd.f32 %v916, %v928
    %v941 = vadd.f32 %v917, %v929
    %v942 = vadd.f32 %v918, %v930
    %v943 = vadd.f32 %v919, %v931
    %v944 = vadd.f32 %v920, %v932
    %v945 = vadd.f32 %v921, %v933
    %958 = vrot.lane.b32.xlu0 %v934, 127
    %v959 = vpop.permute.xlu0 %958
    %960 = vrot.lane.b32.xlu0 %v935, 127
    %v961 = vpop.permute.xlu0 %960
    %962 = vrot.lane.b32.xlu0 %v936, 127
    %v963 = vpop.permute.xlu0 %962
    %964 = vrot.lane.b32.xlu0 %v937, 127
    %v965 = vpop.permute.xlu0 %964
    %966 = vrot.lane.b32.xlu0 %v938, 127
    %v967 = vpop.permute.xlu0 %966
    %968 = vrot.lane.b32.xlu0 %v939, 127
    %v969 = vpop.permute.xlu0 %968
    %970 = vrot.lane.b32.xlu0 %v940, 127
    %v971 = vpop.permute.xlu0 %970
    %972 = vrot.lane.b32.xlu0 %v941, 127
    %v973 = vpop.permute.xlu0 %972
    %974 = vrot.lane.b32.xlu0 %v942, 127
    %v975 = vpop.permute.xlu0 %974
    %976 = vrot.lane.b32.xlu0 %v943, 127
    %v977 = vpop.permute.xlu0 %976
    %978 = vrot.lane.b32.xlu0 %v944, 127
    %v979 = vpop.permute.xlu0 %978
    %980 = vrot.lane.b32.xlu0 %v945, 127
    %v981 = vpop.permute.xlu0 %980
    %v994 = vsel %vm420, %v959, %v934
    %v995 = vsel %vm420, %v961, %v935
    %v996 = vsel %vm420, %v963, %v936
    %v997 = vsel %vm420, %v965, %v937
    %v998 = vsel %vm420, %v967, %v938
    %v999 = vsel %vm420, %v969, %v939
    %v1000 = vsel %vm420, %v971, %v940
    %v1001 = vsel %vm420, %v973, %v941
    %v1002 = vsel %vm420, %v975, %v942
    %v1003 = vsel %vm420, %v977, %v943
    %v1004 = vsel %vm420, %v979, %v944
    %v1005 = vsel %vm420, %v981, %v945
    %1006 = vrot.lane.b32.xlu0 %v934, 1
    %v1007 = vpop.permute.xlu0 %1006
    %1008 = vrot.lane.b32.xlu0 %v935, 1
    %v1009 = vpop.permute.xlu0 %1008
    %1010 = vrot.lane.b32.xlu0 %v936, 1
    %v1011 = vpop.permute.xlu0 %1010
    %1012 = vrot.lane.b32.xlu0 %v937, 1
    %v1013 = vpop.permute.xlu0 %1012
    %1014 = vrot.lane.b32.xlu0 %v938, 1
    %v1015 = vpop.permute.xlu0 %1014
    %1016 = vrot.lane.b32.xlu0 %v939, 1
    %v1017 = vpop.permute.xlu0 %1016
    %1018 = vrot.lane.b32.xlu0 %v940, 1
    %v1019 = vpop.permute.xlu0 %1018
    %1020 = vrot.lane.b32.xlu0 %v941, 1
    %v1021 = vpop.permute.xlu0 %1020
    %1022 = vrot.lane.b32.xlu0 %v942, 1
    %v1023 = vpop.permute.xlu0 %1022
    %1024 = vrot.lane.b32.xlu0 %v943, 1
    %v1025 = vpop.permute.xlu0 %1024
    %1026 = vrot.lane.b32.xlu0 %v944, 1
    %v1027 = vpop.permute.xlu0 %1026
    %1028 = vrot.lane.b32.xlu0 %v945, 1
    %v1029 = vpop.permute.xlu0 %1028
    %v1042 = vsel %vm469, %v934, %v1007
    %v1043 = vsel %vm469, %v935, %v1009
    %v1044 = vsel %vm469, %v936, %v1011
    %v1045 = vsel %vm469, %v937, %v1013
    %v1046 = vsel %vm469, %v938, %v1015
    %v1047 = vsel %vm469, %v939, %v1017
    %v1048 = vsel %vm469, %v940, %v1019
    %v1049 = vsel %vm469, %v941, %v1021
    %v1050 = vsel %vm469, %v942, %v1023
    %v1051 = vsel %vm469, %v943, %v1025
    %v1052 = vsel %vm469, %v944, %v1027
    %v1053 = vsel %vm469, %v945, %v1029
    %v1054 = vadd.f32 %v994, %v1042
    %v1055 = vadd.f32 %v995, %v1043
    %v1056 = vadd.f32 %v996, %v1044
    %v1057 = vadd.f32 %v997, %v1045
    %v1058 = vadd.f32 %v998, %v1046
    %v1059 = vadd.f32 %v999, %v1047
    %v1060 = vadd.f32 %v1000, %v1048
    %v1061 = vadd.f32 %v1001, %v1049
    %v1062 = vadd.f32 %v1002, %v1050
    %v1063 = vadd.f32 %v1003, %v1051
    %v1064 = vadd.f32 %v1004, %v1052
    %v1065 = vadd.f32 %v1005, %v1053
    %1066 = vrot.lane.b32.xlu0 %v934, 126
    %v1067 = vpop.permute.xlu0 %1066
    %1068 = vrot.lane.b32.xlu0 %v935, 126
    %v1069 = vpop.permute.xlu0 %1068
    %1070 = vrot.lane.b32.xlu0 %v936, 126
    %v1071 = vpop.permute.xlu0 %1070
    %1072 = vrot.lane.b32.xlu0 %v937, 126
    %v1073 = vpop.permute.xlu0 %1072
    %1074 = vrot.lane.b32.xlu0 %v938, 126
    %v1075 = vpop.permute.xlu0 %1074
    %1076 = vrot.lane.b32.xlu0 %v939, 126
    %v1077 = vpop.permute.xlu0 %1076
    %1078 = vrot.lane.b32.xlu0 %v940, 126
    %v1079 = vpop.permute.xlu0 %1078
    %1080 = vrot.lane.b32.xlu0 %v941, 126
    %v1081 = vpop.permute.xlu0 %1080
    %1082 = vrot.lane.b32.xlu0 %v942, 126
    %v1083 = vpop.permute.xlu0 %1082
    %1084 = vrot.lane.b32.xlu0 %v943, 126
    %v1085 = vpop.permute.xlu0 %1084
    %1086 = vrot.lane.b32.xlu0 %v944, 126
    %v1087 = vpop.permute.xlu0 %1086
    %1088 = vrot.lane.b32.xlu0 %v945, 126
    %v1089 = vpop.permute.xlu0 %1088
    %v1102 = vsel %vm530, %v1067, %v959
    %v1103 = vsel %vm530, %v1069, %v961
    %v1104 = vsel %vm530, %v1071, %v963
    %v1105 = vsel %vm530, %v1073, %v965
    %v1106 = vsel %vm530, %v1075, %v967
    %v1107 = vsel %vm530, %v1077, %v969
    %v1108 = vsel %vm530, %v1079, %v971
    %v1109 = vsel %vm530, %v1081, %v973
    %v1110 = vsel %vm530, %v1083, %v975
    %v1111 = vsel %vm530, %v1085, %v977
    %v1112 = vsel %vm530, %v1087, %v979
    %v1113 = vsel %vm530, %v1089, %v981
    %v1114 = vsel %vm420, %v1102, %v934
    %v1115 = vsel %vm420, %v1103, %v935
    %v1116 = vsel %vm420, %v1104, %v936
    %v1117 = vsel %vm420, %v1105, %v937
    %v1118 = vsel %vm420, %v1106, %v938
    %v1119 = vsel %vm420, %v1107, %v939
    %v1120 = vsel %vm420, %v1108, %v940
    %v1121 = vsel %vm420, %v1109, %v941
    %v1122 = vsel %vm420, %v1110, %v942
    %v1123 = vsel %vm420, %v1111, %v943
    %v1124 = vsel %vm420, %v1112, %v944
    %v1125 = vsel %vm420, %v1113, %v945
    %1126 = vrot.lane.b32.xlu0 %v934, 2
    %v1127 = vpop.permute.xlu0 %1126
    %1128 = vrot.lane.b32.xlu0 %v935, 2
    %v1129 = vpop.permute.xlu0 %1128
    %1130 = vrot.lane.b32.xlu0 %v936, 2
    %v1131 = vpop.permute.xlu0 %1130
    %1132 = vrot.lane.b32.xlu0 %v937, 2
    %v1133 = vpop.permute.xlu0 %1132
    %1134 = vrot.lane.b32.xlu0 %v938, 2
    %v1135 = vpop.permute.xlu0 %1134
    %1136 = vrot.lane.b32.xlu0 %v939, 2
    %v1137 = vpop.permute.xlu0 %1136
    %1138 = vrot.lane.b32.xlu0 %v940, 2
    %v1139 = vpop.permute.xlu0 %1138
    %1140 = vrot.lane.b32.xlu0 %v941, 2
    %v1141 = vpop.permute.xlu0 %1140
    %1142 = vrot.lane.b32.xlu0 %v942, 2
    %v1143 = vpop.permute.xlu0 %1142
    %1144 = vrot.lane.b32.xlu0 %v943, 2
    %v1145 = vpop.permute.xlu0 %1144
    %1146 = vrot.lane.b32.xlu0 %v944, 2
    %v1147 = vpop.permute.xlu0 %1146
    %1148 = vrot.lane.b32.xlu0 %v945, 2
    %v1149 = vpop.permute.xlu0 %1148
    %v1162 = vsel %vm591, %v1042, %v1127
    %v1163 = vsel %vm591, %v1043, %v1129
    %v1164 = vsel %vm591, %v1044, %v1131
    %v1165 = vsel %vm591, %v1045, %v1133
    %v1166 = vsel %vm591, %v1046, %v1135
    %v1167 = vsel %vm591, %v1047, %v1137
    %v1168 = vsel %vm591, %v1048, %v1139
    %v1169 = vsel %vm591, %v1049, %v1141
    %v1170 = vsel %vm591, %v1050, %v1143
    %v1171 = vsel %vm591, %v1051, %v1145
    %v1172 = vsel %vm591, %v1052, %v1147
    %v1173 = vsel %vm591, %v1053, %v1149
    %v1174 = vadd.f32 %v1114, %v1162
    %v1175 = vadd.f32 %v1115, %v1163
    %v1176 = vadd.f32 %v1116, %v1164
    %v1177 = vadd.f32 %v1117, %v1165
    %v1178 = vadd.f32 %v1118, %v1166
    %v1179 = vadd.f32 %v1119, %v1167
    %v1180 = vadd.f32 %v1120, %v1168
    %v1181 = vadd.f32 %v1121, %v1169
    %v1182 = vadd.f32 %v1122, %v1170
    %v1183 = vadd.f32 %v1123, %v1171
    %v1184 = vadd.f32 %v1124, %v1172
    %v1185 = vadd.f32 %v1125, %v1173
    %v1186 = vmul.f32 %v934, 0.4
    %v1187 = vmul.f32 %v935, 0.4
    %v1188 = vmul.f32 %v936, 0.4
    %v1189 = vmul.f32 %v937, 0.4
    %v1190 = vmul.f32 %v938, 0.4
    %v1191 = vmul.f32 %v939, 0.4
    %v1192 = vmul.f32 %v940, 0.4
    %v1193 = vmul.f32 %v941, 0.4
    %v1194 = vmul.f32 %v942, 0.4
    %v1195 = vmul.f32 %v943, 0.4
    %v1196 = vmul.f32 %v944, 0.4
    %v1197 = vmul.f32 %v945, 0.4
    %v1198 = vmul.f32 %v1054, 0.25
    %v1199 = vmul.f32 %v1055, 0.25
    %v1200 = vmul.f32 %v1056, 0.25
    %v1201 = vmul.f32 %v1057, 0.25
    %v1202 = vmul.f32 %v1058, 0.25
    %v1203 = vmul.f32 %v1059, 0.25
    %v1204 = vmul.f32 %v1060, 0.25
    %v1205 = vmul.f32 %v1061, 0.25
    %v1206 = vmul.f32 %v1062, 0.25
    %v1207 = vmul.f32 %v1063, 0.25
    %v1208 = vmul.f32 %v1064, 0.25
    %v1209 = vmul.f32 %v1065, 0.25
    %v1210 = vadd.f32 %v1186, %v1198
    %v1211 = vadd.f32 %v1187, %v1199
    %v1212 = vadd.f32 %v1188, %v1200
    %v1213 = vadd.f32 %v1189, %v1201
    %v1214 = vadd.f32 %v1190, %v1202
    %v1215 = vadd.f32 %v1191, %v1203
    %v1216 = vadd.f32 %v1192, %v1204
    %v1217 = vadd.f32 %v1193, %v1205
    %v1218 = vadd.f32 %v1194, %v1206
    %v1219 = vadd.f32 %v1195, %v1207
    %v1220 = vadd.f32 %v1196, %v1208
    %v1221 = vadd.f32 %v1197, %v1209
    %v1222 = vmul.f32 %v1174, 0.05
    %v1223 = vmul.f32 %v1175, 0.05
    %v1224 = vmul.f32 %v1176, 0.05
    %v1225 = vmul.f32 %v1177, 0.05
    %v1226 = vmul.f32 %v1178, 0.05
    %v1227 = vmul.f32 %v1179, 0.05
    %v1228 = vmul.f32 %v1180, 0.05
    %v1229 = vmul.f32 %v1181, 0.05
    %v1230 = vmul.f32 %v1182, 0.05
    %v1231 = vmul.f32 %v1183, 0.05
    %v1232 = vmul.f32 %v1184, 0.05
    %v1233 = vmul.f32 %v1185, 0.05
    %v1234 = vadd.f32 %v1210, %v1222
    %v1235 = vadd.f32 %v1211, %v1223
    %v1236 = vadd.f32 %v1212, %v1224
    %v1237 = vadd.f32 %v1213, %v1225
    %v1238 = vadd.f32 %v1214, %v1226
    %v1239 = vadd.f32 %v1215, %v1227
    %v1240 = vadd.f32 %v1216, %v1228
    %v1241 = vadd.f32 %v1217, %v1229
    %v1242 = vadd.f32 %v1218, %v1230
    %v1243 = vadd.f32 %v1219, %v1231
    %v1244 = vadd.f32 %v1220, %v1232
    %v1245 = vadd.f32 %v1221, %v1233
    %v1246 = vsub.f32 %v64, %v1234
    %v1247 = vsub.f32 %v65, %v1235
    %v1248 = vsub.f32 %v66, %v1236
    %v1249 = vsub.f32 %v67, %v1237
    %v1250 = vsub.f32 %v68, %v1238
    %v1251 = vsub.f32 %v69, %v1239
    %v1252 = vsub.f32 %v70, %v1240
    %v1253 = vsub.f32 %v71, %v1241
    %v1254 = vsub.f32 %v72, %v1242
    %v1255 = vsub.f32 %v73, %v1243
    %v1256 = vsub.f32 %v74, %v1244
    %v1257 = vsub.f32 %v75, %v1245
    %v1258 = vmul.f32 %v1246, %v1246
    %v1259 = vmul.f32 %v1247, %v1247
    %v1260 = vmul.f32 %v1248, %v1248
    %v1261 = vmul.f32 %v1249, %v1249
    %v1262 = vmul.f32 %v1250, %v1250
    %v1263 = vmul.f32 %v1251, %v1251
    %v1264 = vmul.f32 %v1252, %v1252
    %v1265 = vmul.f32 %v1253, %v1253
    %v1266 = vmul.f32 %v1254, %v1254
    %v1267 = vmul.f32 %v1255, %v1255
    %v1268 = vmul.f32 %v1256, %v1256
    %v1269 = vmul.f32 %v1257, %v1257
    %v1270 = vadd.f32 %v1258, 1e-06
    %v1271 = vadd.f32 %v1259, 1e-06
    %v1272 = vadd.f32 %v1260, 1e-06
    %v1273 = vadd.f32 %v1261, 1e-06
    %v1274 = vadd.f32 %v1262, 1e-06
    %v1275 = vadd.f32 %v1263, 1e-06
    %v1276 = vadd.f32 %v1264, 1e-06
    %v1277 = vadd.f32 %v1265, 1e-06
    %v1278 = vadd.f32 %v1266, 1e-06
    %v1279 = vadd.f32 %v1267, 1e-06
    %v1280 = vadd.f32 %v1268, 1e-06
    %v1281 = vadd.f32 %v1269, 1e-06
    %v1282 = vrsqrt.pop %v1270
    %v1283 = vmul.f32 %v1270, %v1282
    %vm1284 = vcmp.eq.f32.partialorder %v1270, inf
    %v1285 = vsel %vm1284, %v1270, %v1283
    %vm1286 = vcmp.eq.f32.partialorder %v1270, 0.0
    %v1287 = vand.u32 %v1270, 2147483648
    %v1288 = vsel %vm1286, %v1287, %v1285
    %v1289 = vrsqrt.pop %v1271
    %v1290 = vmul.f32 %v1271, %v1289
    %vm1291 = vcmp.eq.f32.partialorder %v1271, inf
    %v1292 = vsel %vm1291, %v1271, %v1290
    %vm1293 = vcmp.eq.f32.partialorder %v1271, 0.0
    %v1294 = vand.u32 %v1271, 2147483648
    %v1295 = vsel %vm1293, %v1294, %v1292
    %v1296 = vrsqrt.pop %v1272
    %v1297 = vmul.f32 %v1272, %v1296
    %vm1298 = vcmp.eq.f32.partialorder %v1272, inf
    %v1299 = vsel %vm1298, %v1272, %v1297
    %vm1300 = vcmp.eq.f32.partialorder %v1272, 0.0
    %v1301 = vand.u32 %v1272, 2147483648
    %v1302 = vsel %vm1300, %v1301, %v1299
    %v1303 = vrsqrt.pop %v1273
    %v1304 = vmul.f32 %v1273, %v1303
    %vm1305 = vcmp.eq.f32.partialorder %v1273, inf
    %v1306 = vsel %vm1305, %v1273, %v1304
    %vm1307 = vcmp.eq.f32.partialorder %v1273, 0.0
    %v1308 = vand.u32 %v1273, 2147483648
    %v1309 = vsel %vm1307, %v1308, %v1306
    %v1310 = vrsqrt.pop %v1274
    %v1311 = vmul.f32 %v1274, %v1310
    %vm1312 = vcmp.eq.f32.partialorder %v1274, inf
    %v1313 = vsel %vm1312, %v1274, %v1311
    %vm1314 = vcmp.eq.f32.partialorder %v1274, 0.0
    %v1315 = vand.u32 %v1274, 2147483648
    %v1316 = vsel %vm1314, %v1315, %v1313
    %v1317 = vrsqrt.pop %v1275
    %v1318 = vmul.f32 %v1275, %v1317
    %vm1319 = vcmp.eq.f32.partialorder %v1275, inf
    %v1320 = vsel %vm1319, %v1275, %v1318
    %vm1321 = vcmp.eq.f32.partialorder %v1275, 0.0
    %v1322 = vand.u32 %v1275, 2147483648
    %v1323 = vsel %vm1321, %v1322, %v1320
    %v1324 = vrsqrt.pop %v1276
    %v1325 = vmul.f32 %v1276, %v1324
    %vm1326 = vcmp.eq.f32.partialorder %v1276, inf
    %v1327 = vsel %vm1326, %v1276, %v1325
    %vm1328 = vcmp.eq.f32.partialorder %v1276, 0.0
    %v1329 = vand.u32 %v1276, 2147483648
    %v1330 = vsel %vm1328, %v1329, %v1327
    %v1331 = vrsqrt.pop %v1277
    %v1332 = vmul.f32 %v1277, %v1331
    %vm1333 = vcmp.eq.f32.partialorder %v1277, inf
    %v1334 = vsel %vm1333, %v1277, %v1332
    %vm1335 = vcmp.eq.f32.partialorder %v1277, 0.0
    %v1336 = vand.u32 %v1277, 2147483648
    %v1337 = vsel %vm1335, %v1336, %v1334
    %v1338 = vrsqrt.pop %v1278
    %v1339 = vmul.f32 %v1278, %v1338
    %vm1340 = vcmp.eq.f32.partialorder %v1278, inf
    %v1341 = vsel %vm1340, %v1278, %v1339
    %vm1342 = vcmp.eq.f32.partialorder %v1278, 0.0
    %v1343 = vand.u32 %v1278, 2147483648
    %v1344 = vsel %vm1342, %v1343, %v1341
    %v1345 = vrsqrt.pop %v1279
    %v1346 = vmul.f32 %v1279, %v1345
    %vm1347 = vcmp.eq.f32.partialorder %v1279, inf
    %v1348 = vsel %vm1347, %v1279, %v1346
    %vm1349 = vcmp.eq.f32.partialorder %v1279, 0.0
    %v1350 = vand.u32 %v1279, 2147483648
    %v1351 = vsel %vm1349, %v1350, %v1348
    %v1352 = vrsqrt.pop %v1280
    %v1353 = vmul.f32 %v1280, %v1352
    %vm1354 = vcmp.eq.f32.partialorder %v1280, inf
    %v1355 = vsel %vm1354, %v1280, %v1353
    %vm1356 = vcmp.eq.f32.partialorder %v1280, 0.0
    %v1357 = vand.u32 %v1280, 2147483648
    %v1358 = vsel %vm1356, %v1357, %v1355
    %v1359 = vrsqrt.pop %v1281
    %v1360 = vmul.f32 %v1281, %v1359
    %vm1361 = vcmp.eq.f32.partialorder %v1281, inf
    %v1362 = vsel %vm1361, %v1281, %v1360
    %vm1363 = vcmp.eq.f32.partialorder %v1281, 0.0
    %v1364 = vand.u32 %v1281, 2147483648
    %v1365 = vsel %vm1363, %v1364, %v1362
    %vm1366 = vcmask 130048
    %v1367 = vsel %vm1366, %v1288, 0.0
    %v1368 = vsel %vm1366, %v1302, 0.0
    %v1369 = vadd.f32 %v1367, %v1368
    %v1370 = vsel %vm1366, %v1316, 0.0
    %v1371 = vadd.f32 %v1369, %v1370
    %v1372 = vsel %vm1366, %v1330, 0.0
    %v1373 = vadd.f32 %v1371, %v1372
    %v1374 = vsel %vm1366, %v1344, 0.0
    %v1375 = vadd.f32 %v1373, %v1374
    %v1376 = vsel %vm1366, %v1358, 0.0
    %v1377 = vadd.f32 %v1375, %v1376
    %v1378 = vsel %vm1366, %v1295, 0.0
    %v1379 = vsel %vm1366, %v1309, 0.0
    %v1380 = vadd.f32 %v1378, %v1379
    %v1381 = vsel %vm1366, %v1323, 0.0
    %v1382 = vadd.f32 %v1380, %v1381
    %v1383 = vsel %vm1366, %v1337, 0.0
    %v1384 = vadd.f32 %v1382, %v1383
    %v1385 = vsel %vm1366, %v1351, 0.0
    %v1386 = vadd.f32 %v1384, %v1385
    %v1387 = vsel %vm1366, %v1365, 0.0
    %v1388 = vadd.f32 %v1386, %v1387
    %v1389 = vsel %vm1366, %v1377, 0.0
    %v1390 = vsel %vm1366, %v1388, 0.0
    %v1391 = vadd.f32 %v1389, %v1390
    %1392 = vadd.xlane.f32.xlu0 %v1391
    %v1393 = vpop.xlane.xlu0 %1392
    %v1394 = vrot.slane %v1393, 4
    %v1395 = vadd.f32 %v1393, %v1394
    %v1396 = vrot.slane %v1395, 2
    %v1397 = vadd.f32 %v1395, %v1396
    %v1398 = vrot.slane %v1397, 1
    %v1399 = vadd.f32 %v1397, %v1398
    %s1400 = vtos %v1399
    %v1401 = vstv %s1400
    %1402 = vst [vmem:[#allocation7] sm:$0xff] %v1401
    // Predicated region
    $region18: #{tpu_custom_call.1} parent=1 // pred_check
      _
    $region19: #{tpu_custom_call.1} parent=1 // pred_check_branch
      %1404 = sbr.rel (0) target = $region21
    $region20: #{tpu_custom_call.1} parent=1 // pred_region
      %s1406 = ssub.s32 128, 128
      %1407 = vsyncadd [#allocation4], %s1406
      %s1409 = sshll.u32 [#allocation7], 4
      %s1410 = int_to_ptr.vmem [resolvable:$true] %s1409
      %1412 = dma.vmem_to_hbm [thread:$0]  %s1410, 128, %s2, [#allocation4]
    $region21: #{tpu_custom_call.1} parent=1 // pred_fallthru
      _
    // Predicated region
    $region22: #{tpu_custom_call.1} parent=1 // pred_check
      _
    $region23: #{tpu_custom_call.1} parent=1 // pred_check_branch
      %1414 = sbr.rel (0) target = $region25
    $region24: #{tpu_custom_call.1} parent=1 // pred_region
      %1415 = dma.done [#allocation4], 128
    $region25: #{tpu_custom_call.1} parent=1 // pred_fallthru
      _
    %1416 = vsyncpa [#allocation3], 1
    %1417 = vsyncpa [#allocation6], 1
    %1418 = vsyncpa [#allocation4], 1

</llo_original>
